<compile_context>
chip_gen: v7x
topology: tpu7x:2x2x1
jax: 0.10.0
libtpu: 0.0.40
codegen_flags: <defaults>
</compile_context>

<pallas_src>
import jax
import jax.numpy as jnp
from jax import lax
from jax.experimental import pallas as pl
from jax.experimental.pallas import tpu as pltpu


def _round_up(x, m):
    return ((x + m - 1) // m) * m


_VMEM_LIMIT = 32 * 1024 * 1024  # fits v5e/v6e (128 MiB) and v7x (64 MiB per TC)


# --------------------- one-layer decoder: 1x1 conv in NCHW -------------------

def _conv1x1_nchw_kernel(x_ref, w_ref, b_ref, o_ref):
    # Per image: (Cout, Cin) @ (Cin, H*W) + bias on the MXU, f32 accumulation.
    acc = jnp.dot(w_ref[...], x_ref[0], preferred_element_type=jnp.float32)
    o_ref[0] = (acc + b_ref[...]).astype(o_ref.dtype)


def pallas_conv1x1_nchw(z, w, b, *, compute_dtype=jnp.bfloat16):
    """1x1 conv directly in NCHW layout (no NCHW<->NHWC transposes).

    z: (N, Cin, H, W)   encoder features
    w: (Cout, Cin)      1x1 conv weight
    b: (Cout,)          bias
    Returns (N, Cout, H, W); dtype = compute_dtype if bf16 else float32.
    """
    N, C, H, W = z.shape
    Cout = w.shape[0]
    P = H * W
    out_dtype = compute_dtype if compute_dtype == jnp.bfloat16 else jnp.float32

    zf = z.reshape(N, C, P).astype(compute_dtype)
    wf = w.astype(compute_dtype)
    bf = b.astype(jnp.float32).reshape(Cout, 1)

    y = pl.pallas_call(
        _conv1x1_nchw_kernel,
        out_shape=jax.ShapeDtypeStruct((N, Cout, P), out_dtype),
        grid=(N,),
        in_specs=[pl.BlockSpec((1, C, P), lambda n: (n, 0, 0)),
                  pl.BlockSpec((Cout, C), lambda n: (0, 0)),   # weight resident
                  pl.BlockSpec((Cout, 1), lambda n: (0, 0))],
        out_specs=pl.BlockSpec((1, Cout, P), lambda n: (n, 0, 0)),
        compiler_params=pltpu.CompilerParams(
            dimension_semantics=("parallel",),
            vmem_limit_bytes=_VMEM_LIMIT),
    )(zf, wf, bf)
    return y.reshape(N, Cout, H, W)


# ------------------ two-layer decoder: fused conv3x3 + ReLU + conv3x3 --------

def _make_fused_decoder_kernel(H, W, P, off0, rows, cin, cmid, cout, dt):
    """conv3x3(+folded BN)+ReLU+conv3x3 on one NHWC image, all in VMEM."""
    tail = rows - off0 - P  # bottom halo rows (= W + 1)

    def kernel(x_ref, wa_ref, ba_ref, wb_ref, bb_ref, o_ref,
               xpad_ref, midpad_ref, colsa_ref, colsb_ref):
        # Column masks for the +/-1 horizontal taps: a shift along the flat
        # pixel axis wraps across image rows; wrapped pixels must contribute 0.
        col = lax.broadcasted_iota(jnp.int32, (P, 1), 0) % W
        not_first = col != 0           # no dx = -1 contribution at w == 0
        not_last = col != (W - 1)      # no dx = +1 contribution at w == W-1

        def conv3x3(src_ref, cols_ref, w_ref, n_in):
            # Hoisted full-width masks (broadcast once per conv, not per tap).
            nf = jnp.broadcast_to(not_first, (P, n_in))
            nl = jnp.broadcast_to(not_last, (P, n_in))
            # In-VMEM im2col: 9 shifted taps stacked along lanes, then ONE
            # matmul with K = 9*n_in (no per-tap accumulate adds).
            for ky in range(3):
                for kx in range(3):
                    t = ky * 3 + kx
                    start = off0 + (ky - 1) * W + (kx - 1)
                    sh = src_ref[pl.ds(start, P), :]
                    if kx == 0:
                        sh = jnp.where(nf, sh, jnp.zeros_like(sh))
                    elif kx == 2:
                        sh = jnp.where(nl, sh, jnp.zeros_like(sh))
                    cols_ref[:, t * n_in:(t + 1) * n_in] = sh
            return jnp.dot(cols_ref[...], w_ref[...],
                           preferred_element_type=jnp.float32)

        # Zero only the halo rows; the interior rows are fully overwritten
        # below, so no full-buffer re-zeroing (saves vst slot time).
        xpad_ref[0:off0, :] = jnp.zeros((off0, cin), dt)
        xpad_ref[off0 + P:rows, :] = jnp.zeros((tail, cin), dt)
        midpad_ref[0:off0, :] = jnp.zeros((off0, cmid), dt)
        midpad_ref[off0 + P:rows, :] = jnp.zeros((tail, cmid), dt)

        # conv-a (BatchNorm folded into wa/ba) + ReLU
        xpad_ref[pl.ds(off0, P), :] = x_ref[0]
        mid = jnp.maximum(conv3x3(xpad_ref, colsa_ref, wa_ref, cin)
                          + ba_ref[...], 0.0)

        # conv-b on the VMEM-resident mid tensor (never touches HBM)
        midpad_ref[pl.ds(off0, P), :] = mid.astype(dt)
        out = conv3x3(midpad_ref, colsb_ref, wb_ref, cmid) + bb_ref[...]
        o_ref[0] = out.astype(o_ref.dtype)

    return kernel


def pallas_fused_two_conv(x_nhwc, wa_2d, ba, wb_2d, bb, H, W, *,
                          compute_dtype=jnp.bfloat16):
    """Fused two-layer decoder body.

    x_nhwc: (N, H*W, Cin)        flattened NHWC features
    wa_2d:  (9*Cin, Cmid)        conv-a taps (BN folded), tap-major / channel-minor
    ba:     (Cmid,)              folded conv-a bias
    wb_2d:  (9*Cmid, Cout)       conv-b taps
    bb:     (Cout,)              conv-b bias
    Returns (N, H*W, Cout); dtype = compute_dtype if bf16 else float32.
    """
    N, P, Cin = x_nhwc.shape
    assert P == H * W
    Ka, Cmid = wa_2d.shape
    Kb, Cout = wb_2d.shape
    assert Ka == 9 * Cin and Kb == 9 * Cmid
    off0 = _round_up(W + 1, 8)           # 8-aligned write offset, >= one-row halo
    rows = off0 + P + W + 1              # halo-padded flat pixel rows
    out_dtype = compute_dtype if compute_dtype == jnp.bfloat16 else jnp.float32

    kernel = _make_fused_decoder_kernel(H, W, P, off0, rows, Cin, Cmid, Cout,
                                        compute_dtype)
    return pl.pallas_call(
        kernel,
        out_shape=jax.ShapeDtypeStruct((N, P, Cout), out_dtype),
        grid=(N,),
        in_specs=[pl.BlockSpec((1, P, Cin), lambda n: (n, 0, 0)),
                  pl.BlockSpec((9 * Cin, Cmid), lambda n: (0, 0)),
                  pl.BlockSpec((1, Cmid), lambda n: (0, 0)),
                  pl.BlockSpec((9 * Cmid, Cout), lambda n: (0, 0)),
                  pl.BlockSpec((1, Cout), lambda n: (0, 0))],
        out_specs=pl.BlockSpec((1, P, Cout), lambda n: (n, 0, 0)),
        scratch_shapes=[pltpu.VMEM((rows, Cin), compute_dtype),
                        pltpu.VMEM((rows, Cmid), compute_dtype),
                        pltpu.VMEM((P, 9 * Cin), compute_dtype),
                        pltpu.VMEM((P, 9 * Cmid), compute_dtype)],
        compiler_params=pltpu.CompilerParams(
            dimension_semantics=("parallel",),
            vmem_limit_bytes=_VMEM_LIMIT),
    )(x_nhwc.astype(compute_dtype),
      wa_2d.astype(compute_dtype), ba.astype(jnp.float32).reshape(1, Cmid),
      wb_2d.astype(compute_dtype), bb.astype(jnp.float32).reshape(1, Cout))


# ------------------------------- JAX glue -----------------------------------

def pixel_shuffle_nchw(x, r):
    # torch.nn.PixelShuffle: (N, C*r*r, H, W) -> (N, C, H*r, W*r)
    N, Crr, H, W = x.shape
    C = Crr // (r * r)
    x = x.reshape(N, C, r, r, H, W)
    x = x.transpose(0, 1, 4, 2, 5, 3)      # N, C, H, r, W, r
    return x.reshape(N, C, H * r, W * r)


def pixel_shuffle_nhwc_to_nchw(y, r):
    # y: (N, H, W, C*r*r) with channel index = c*r*r + i*r + j -> (N, C, H*r, W*r)
    N, H, W, Crr = y.shape
    C = Crr // (r * r)
    y = y.reshape(N, H, W, C, r, r)
    y = y.transpose(0, 3, 1, 4, 2, 5)      # N, C, H, r, W, r
    return y.reshape(N, C, H * r, W * r)


# ----------------------------- LinearProbing --------------------------------

class LinearProbingPallas:
    """JAX/Pallas port of LinearProbing (decoder part; encoder is external)."""

    BN_EPS = 1e-5

    def __init__(self, num_features, encoder_stride, layer_num=1, key=None,
                 compute_dtype=jnp.bfloat16):
        self.num_features = num_features
        self.encoder_stride = encoder_stride
        self.layer_num = layer_num
        self.compute_dtype = compute_dtype
        r2 = encoder_stride ** 2
        ks = jax.random.split(key if key is not None else jax.random.PRNGKey(0), 10)
        f32 = jnp.float32

        # one_layer_decoder: Conv2d(num_features -> r^2, kernel 1) + PixelShuffle(r)
        self.w1 = 0.05 * jax.random.normal(ks[0], (r2, num_features, 1, 1), f32)
        self.b1 = 0.05 * jax.random.normal(ks[1], (r2,), f32)

        # two_layer_decoder: Conv3x3(num_features -> 4*r^2) + BN + ReLU +
        #                    Conv3x3(4*r^2 -> r^2) + PixelShuffle(r)
        mid = r2 * 4
        self.wa = 0.05 * jax.random.normal(ks[2], (mid, num_features, 3, 3), f32)
        self.ba = 0.05 * jax.random.normal(ks[3], (mid,), f32)
        self.gamma = 1.0 + 0.1 * jax.random.normal(ks[4], (mid,), f32)
        self.beta = 0.1 * jax.random.normal(ks[5], (mid,), f32)
        self.run_mean = 0.1 * jax.random.normal(ks[6], (mid,), f32)
        self.run_var = 0.5 + jnp.abs(jax.random.normal(ks[7], (mid,), f32))
        self.wb = 0.05 * jax.random.normal(ks[8], (r2, mid, 3, 3), f32)
        self.bb = 0.05 * jax.random.normal(ks[9], (r2,), f32)

    def __call__(self, z):
        # z = encoder(x), shape (N, num_features, H, W)
        N, C, H, W = z.shape
        r = self.encoder_stride
        r2 = r * r

        if self.layer_num == 2:
            mid_t = 4 * r2
            # Fold eval-mode BatchNorm into conv-a weights/bias (host-side prep).
            scale = self.gamma / jnp.sqrt(self.run_var + self.BN_EPS)
            shift = self.beta - self.run_mean * scale
            # (Cout, Cin, 3, 3) -> (3, 3, Cin, Cout) -> (9*Cin, Cout), tap-major
            wa_k = jnp.transpose(self.wa, (2, 3, 1, 0)).reshape(9, C, mid_t)
            wa_k = wa_k * scale[None, None, :]
            ba_f = self.ba * scale + shift
            wa_2d = wa_k.reshape(9 * C, mid_t)
            wb_2d = jnp.transpose(self.wb, (2, 3, 1, 0)).reshape(9 * mid_t, r2)

            x_flat = z.transpose(0, 2, 3, 1).reshape(N, H * W, C)  # NHWC, flat pixels
            y = pallas_fused_two_conv(x_flat, wa_2d, ba_f, wb_2d, self.bb, H, W,
                                      compute_dtype=self.compute_dtype)
            y = y.reshape(N, H, W, r2)
            return pixel_shuffle_nhwc_to_nchw(y, r)
        else:
            # 1x1 conv stays in NCHW (no layout transposes around the kernel).
            w_flat = self.w1[:, :, 0, 0]                           # (r^2, Cin)
            y = pallas_conv1x1_nchw(z, w_flat, self.b1,
                                    compute_dtype=self.compute_dtype)
            return pixel_shuffle_nchw(y, r)


# ------------------------------ reference -----------------------------------

def _ref_conv(z, w, b, padding):
    y = lax.conv_general_dilated(
        z, w, (1, 1), padding,
        dimension_numbers=('NCHW', 'OIHW', 'NCHW'),
        precision=lax.Precision.HIGHEST)
    return y + b[None, :, None, None]


def ref_forward(m, z):
    if m.layer_num == 2:
        y = _ref_conv(z, m.wa, m.ba, 'SAME')
        scale = m.gamma / jnp.sqrt(m.run_var + m.BN_EPS)
        shift = m.beta - m.run_mean * scale
        y = y * scale[None, :, None, None] + shift[None, :, None, None]
        y = jnp.maximum(y, 0.0)
        y = _ref_conv(y, m.wb, m.bb, 'SAME')
    else:
        y = _ref_conv(z, m.w1, m.b1, 'VALID')
    return pixel_shuffle_nchw(y, m.encoder_stride)


# --------------------------------- main --------------------------------------

if __name__ == "__main__":
    N, C, H, W = 2, 32, 8, 8            # encoder features: num_features=32
    stride = 4                          # encoder_stride=4
    z = jax.random.normal(jax.random.PRNGKey(0), (N, C, H, W), jnp.float32)

    # f32 compute instances for the tight numeric self-check.
    m1 = LinearProbingPallas(C, stride, layer_num=1, key=jax.random.PRNGKey(1),
                             compute_dtype=jnp.float32)
    out1 = jax.block_until_ready(m1(z))
    assert out1.shape == (N, 1, H * stride, W * stride), out1.shape
    assert jnp.allclose(out1, ref_forward(m1, z), atol=1e-3, rtol=1e-3), \
        "layer_num=1 mismatch"

    m2 = LinearProbingPallas(C, stride, layer_num=2, key=jax.random.PRNGKey(2),
                             compute_dtype=jnp.float32)
    out2 = jax.block_until_ready(m2(z))
    assert out2.shape == (N, 1, H * stride, W * stride), out2.shape
    assert jnp.allclose(out2, ref_forward(m2, z), atol=1e-3, rtol=1e-3), \
        "layer_num=2 mismatch"

    # bf16 compute (default, MXU-native on v5e/v6e/v7x); f32 accumulation,
    # so only input/weight rounding error -> loose tolerance.
    m2b = LinearProbingPallas(C, stride, layer_num=2, key=jax.random.PRNGKey(2))
    out2b = jax.block_until_ready(m2b(z))
    assert out2b.shape == (N, 1, H * stride, W * stride)
    assert jnp.allclose(out2b.astype(jnp.float32), ref_forward(m2b, z),
                        atol=1e-1, rtol=1e-1), "layer_num=2 bf16 mismatch"

    print("KERNEL_OK")
</pallas_src>

<mosaic_0001>
module attributes {stable_mosaic.version = 11 : i64} {
  func.func @_conv1x1_nchw_kernel(%arg0: i32, %arg1: memref<1x32x64xf32, #tpu.memory_space<vmem>>, %arg2: memref<16x32xf32, #tpu.memory_space<vmem>>, %arg3: memref<16x1xf32, #tpu.memory_space<vmem>>, %arg4: memref<1x16x64xf32, #tpu.memory_space<vmem>>) attributes {dimension_semantics = [#tpu.dimension_semantics<parallel>], iteration_bounds = array<i64: 2>, scalar_prefetch = 0 : i64, scratch_operands = 0 : i64, tpu.core_type = #tpu.core_type<tc>, window_params = [{transform_indices = @transform_0, window_bounds = array<i64: 1, 32, 64>}, {pipeline_mode = #tpu.pipeline_mode<synchronous>, transform_indices = @transform_1, window_bounds = array<i64: 16, 32>}, {pipeline_mode = #tpu.pipeline_mode<synchronous>, transform_indices = @transform_2, window_bounds = array<i64: 16, 1>}, {transform_indices = @transform_3, window_bounds = array<i64: 1, 16, 64>}]} {
    %c0 = arith.constant 0 : index
    %c0_0 = arith.constant 0 : index
    %0 = vector.load %arg2[%c0, %c0_0] : memref<16x32xf32, #tpu.memory_space<vmem>>, vector<16x32xf32>
    %c0_1 = arith.constant 0 : index
    %c0_2 = arith.constant 0 : index
    %c0_3 = arith.constant 0 : index
    %1 = vector.load %arg1[%c0_1, %c0_2, %c0_3] : memref<1x32x64xf32, #tpu.memory_space<vmem>>, vector<1x32x64xf32>
    %2 = vector.shape_cast %1 : vector<1x32x64xf32> to vector<32x64xf32>
    %cst = arith.constant dense<0.000000e+00> : vector<16x64xf32>
    %3 = tpu.matmul %0, %2, %cst {dimension_numbers = #tpu.dot_dimension_numbers<[1], [0], [0], [1], [0, 0, 1, 1], [], []>} : vector<16x32xf32>, vector<32x64xf32>, vector<16x64xf32> -> vector<16x64xf32>
    %c0_4 = arith.constant 0 : index
    %c0_5 = arith.constant 0 : index
    %4 = vector.load %arg3[%c0_4, %c0_5] : memref<16x1xf32, #tpu.memory_space<vmem>>, vector<16x1xf32>
    %5 = vector.broadcast %4 : vector<16x1xf32> to vector<16x64xf32>
    %6 = arith.addf %3, %5 : vector<16x64xf32>
    %c0_6 = arith.constant 0 : index
    %c0_7 = arith.constant 0 : index
    %c0_8 = arith.constant 0 : index
    %7 = vector.load %arg4[%c0_6, %c0_7, %c0_8] : memref<1x16x64xf32, #tpu.memory_space<vmem>>, vector<1x16x64xf32>
    %8 = vector.shape_cast %7 : vector<1x16x64xf32> to vector<16x64xf32>
    %9 = vector.shape_cast %6 : vector<16x64xf32> to vector<1x16x64xf32>
    tpu.vector_store %arg4[%c0_6, %c0_7, %c0_8], %9 {strides = array<i32>} : memref<1x16x64xf32, #tpu.memory_space<vmem>>, vector<1x16x64xf32>,
    return
  }
  func.func @transform_0(%arg0: i32) -> (i32, i32, i32) {
    %c0_i32 = arith.constant 0 : i32
    %c0_i32_0 = arith.constant 0 : i32
    %c0_i32_1 = arith.constant 0 : i32
    return %arg0, %c0_i32, %c0_i32_0 : i32, i32, i32
  }
  func.func @transform_1(%arg0: i32) -> (i32, i32) {
    %c0_i32 = arith.constant 0 : i32
    %c0_i32_0 = arith.constant 0 : i32
    %c0_i32_1 = arith.constant 0 : i32
    return %c0_i32, %c0_i32_0 : i32, i32
  }
  func.func @transform_2(%arg0: i32) -> (i32, i32) {
    %c0_i32 = arith.constant 0 : i32
    %c0_i32_0 = arith.constant 0 : i32
    %c0_i32_1 = arith.constant 0 : i32
    return %c0_i32, %c0_i32_0 : i32, i32
  }
  func.func @transform_3(%arg0: i32) -> (i32, i32, i32) {
    %c0_i32 = arith.constant 0 : i32
    %c0_i32_0 = arith.constant 0 : i32
    %c0_i32_1 = arith.constant 0 : i32
    return %arg0, %c0_i32, %c0_i32_0 : i32, i32, i32
  }
}

</mosaic_0001>

<llo_original>
// kernel: tpu_custom_call.1
$region0: #{tpu_custom_call.1}
  #allocation0 [shape = 'u32[]', space=smem, size = 0x4, offset = 0x4, fixed_abs, tag = 'smem constant byte address 0x4 - core index']
  #allocation1 [shape = 'u32[144,128]{1,0:T(1,128)}', space=vmem, size = 0x12000, scoped, tag = 'internal scratch']
  %s0 = inlined_call_operand.hbm [shape: f32[2,32,64], index: 0, kind: input, shape index: {}]
  %s1 = inlined_call_operand.vmem [shape: f32[16,32], index: 1, kind: input, shape index: {}]
  %s2 = inlined_call_operand.vmem [shape: f32[16,1], index: 2, kind: input, shape index: {}]
  %s3 = inlined_call_operand.hbm [shape: f32[2,16,64], index: 3, kind: output, shape index: {}]
  %s4 = sld [smem:[#allocation0]]
  $region49: #{tpu_custom_call.1} parent=0
    _
  %s6 = ssub.s32 1, %s4
  %s7 = scalar_select 0, %s6, %s4
  $region1: #{tpu_custom_call.1} parent=0
    #allocation2 [shape = 'u8[32768]{0}', space=vmem, size = 0x8000, scoped, tag = 'input window, operand 0']
    #allocation3 [shape = 's32[2]{0}', space=sflag, size = 0x8, scoped, tag = 'scoped memory for tpu_custom_call.1']
    #allocation4 [shape = 's32[2]{0}', space=sflag, size = 0x8, scoped, tag = 'scoped memory for tpu_custom_call.1']
    #allocation5 [shape = 'u8[16384]{0}', space=vmem, size = 0x4000, scoped, tag = 'output window, operand 0']
    %8 = vsyncpa [#allocation3], 0
    %s9 = scalar_lea.sflag [#allocation3], 1
    %10 = vsyncpa %s9, 0
    %11 = vsyncpa [#allocation4], 0
    %s12 = scalar_lea.sflag [#allocation4], 1
    %13 = vsyncpa %s12, 0
    loop: start=0, step=1, limit=4
    $region2: #{tpu_custom_call.1} parent=1 // loop_pre_header
      _
    $region3: #{tpu_custom_call.1} parent=1 // loop_header
      %s15 = sphi 0, %s19
      %p16 = scmp.ge.s32.totalorder %s15, 4
      %s25 = sphi 0, %s27
      %s28 = sphi 0, %s25
      %s29 = sphi 0, %s28
      %s45 = sphi 0, %s29
      %s49 = sphi 0, %s49
      %s51 = sphi 0, %s49
      %s52 = sphi 0, %s51
      %s66 = sphi 0, %s52
      %s70 = sphi 0, %s70
      %s72 = sphi 0, %s70
      %s73 = sphi 0, %s72
      %s87 = sphi 0, %s73
      %s93 = sphi 0, %s95
      %s96 = sphi 0, %s93
      %s97 = sphi 0, %s96
      %s113 = sphi 0, %s97
    $region4: #{tpu_custom_call.1} parent=1 // loop_header_branch
      %18 = sbr.rel (%p16) target = $region8
    $region5: #{tpu_custom_call.1} parent=1 // loop_body
      %s20 = ssub.s32 %s15, 1
      %s21 = ssub.s32 %s15, 2
      %s22 = sadd.s32 %s15, 1
      %s23 = ssub.s32 %s15, %s22
      %p24 = scmp.eq.s32.totalorder %s23, 0
      %s26 = sadd.s32 %s25, 1
      %s27 = scalar_select %p24, %s25, %s26
      %p30 = pneg %p24
      %p31 = scmp.eq.s32.totalorder %s15, 1
      %p32 = por %p30, %p31
      %p33 = scmp.ne.s32.totalorder %s25, %s28
      %p34 = scmp.eq.s32.totalorder %s15, 0
      %p35 = por %p33, %p34
      %p36 = scmp.ne.s32.totalorder %s25, %s28
      %p37 = scmp.eq.s32.totalorder %s20, 1
      %p38 = por %p36, %p37
      %p39 = scmp.ne.s32.totalorder %s28, %s29
      %p40 = scmp.eq.s32.totalorder %s20, 0
      %p41 = por %p39, %p40
      %p42 = scmp.ne.s32.totalorder %s28, %s29
      %p43 = scmp.eq.s32.totalorder %s21, 1
      %p44 = por %p42, %p43
      %p46 = scmp.ne.s32.totalorder %s29, %s45
      %p47 = scmp.eq.s32.totalorder %s21, 0
      %p48 = por %p46, %p47
      %s50 = sadd.s32 %s49, 1
      %p53 = scmp.eq.s32.totalorder %s15, 1
      %p54 = scmp.ne.s32.totalorder %s49, %s51
      %p55 = scmp.eq.s32.totalorder %s15, 0
      %p56 = por %p54, %p55
      %p57 = scmp.ne.s32.totalorder %s49, %s51
      %p58 = scmp.eq.s32.totalorder %s20, 1
      %p59 = por %p57, %p58
      %p60 = scmp.ne.s32.totalorder %s51, %s52
      %p61 = scmp.eq.s32.totalorder %s20, 0
      %p62 = por %p60, %p61
      %p63 = scmp.ne.s32.totalorder %s51, %s52
      %p64 = scmp.eq.s32.totalorder %s21, 1
      %p65 = por %p63, %p64
      %p67 = scmp.ne.s32.totalorder %s52, %s66
      %p68 = scmp.eq.s32.totalorder %s21, 0
      %p69 = por %p67, %p68
      %s71 = sadd.s32 %s70, 1
      %p74 = scmp.eq.s32.totalorder %s15, 1
      %p75 = scmp.ne.s32.totalorder %s70, %s72
      %p76 = scmp.eq.s32.totalorder %s15, 0
      %p77 = por %p75, %p76
      %p78 = scmp.ne.s32.totalorder %s70, %s72
      %p79 = scmp.eq.s32.totalorder %s20, 1
      %p80 = por %p78, %p79
      %p81 = scmp.ne.s32.totalorder %s72, %s73
      %p82 = scmp.eq.s32.totalorder %s20, 0
      %p83 = por %p81, %p82
      %p84 = scmp.ne.s32.totalorder %s72, %s73
      %p85 = scmp.eq.s32.totalorder %s21, 1
      %p86 = por %p84, %p85
      %p88 = scmp.ne.s32.totalorder %s73, %s87
      %p89 = scmp.eq.s32.totalorder %s21, 0
      %p90 = por %p88, %p89
      %s91 = ssub.s32 %s15, %s22
      %p92 = scmp.eq.s32.totalorder %s91, 0
      %s94 = sadd.s32 %s93, 1
      %s95 = scalar_select %p92, %s93, %s94
      %p98 = pneg %p92
      %p99 = scmp.eq.s32.totalorder %s15, 1
      %p100 = por %p98, %p99
      %p101 = scmp.ne.s32.totalorder %s93, %s96
      %p102 = scmp.eq.s32.totalorder %s15, 0
      %p103 = por %p101, %p102
      %p104 = scmp.ne.s32.totalorder %s93, %s96
      %p105 = scmp.eq.s32.totalorder %s20, 1
      %p106 = por %p104, %p105
      %p107 = scmp.ne.s32.totalorder %s96, %s97
      %p108 = scmp.eq.s32.totalorder %s20, 0
      %p109 = por %p107, %p108
      %p110 = scmp.ne.s32.totalorder %s96, %s97
      %p111 = scmp.eq.s32.totalorder %s21, 1
      %p112 = por %p110, %p111
      %p114 = scmp.ne.s32.totalorder %s97, %s113
      %p115 = scmp.eq.s32.totalorder %s21, 0
      %p116 = por %p114, %p115
      %p117 = scmp.le.s32.totalorder 1, %s15
      %p118 = scmp.lt.s32.totalorder %s15, 3
      %p119 = pnand %p117, %p118
      %p120 = pneg %p119
      // Predicated region
      $region9: #{tpu_custom_call.1} parent=5 // pred_check
        _
      $region10: #{tpu_custom_call.1} parent=5 // pred_check_branch
        %122 = sbr.rel (%p119) target = $region12
      $region11: #{tpu_custom_call.1} parent=5 // pred_region
        %s123 = ssub.s32 %s15, 1
        // Predicated region
        $region13: #{tpu_custom_call.1} parent=11 // pred_check
          %p124 = pneg %p62
        $region14: #{tpu_custom_call.1} parent=11 // pred_check_branch
          %126 = sbr.rel (%p124) target = $region16
        $region15: #{tpu_custom_call.1} parent=11 // pred_region
          _
        $region16: #{tpu_custom_call.1} parent=11 // pred_fallthru
          _
        // Predicated region
        $region17: #{tpu_custom_call.1} parent=11 // pred_check
          %p127 = pneg %p83
        $region18: #{tpu_custom_call.1} parent=11 // pred_check_branch
          %129 = sbr.rel (%p127) target = $region20
        $region19: #{tpu_custom_call.1} parent=11 // pred_region
          _
        $region20: #{tpu_custom_call.1} parent=11 // pred_fallthru
          _
      $region12: #{tpu_custom_call.1} parent=5 // pred_fallthru
        _
      %p130 = scmp.lt.s32.totalorder %s15, 2
      // Predicated region
      $region21: #{tpu_custom_call.1} parent=5 // pred_check
        %p131 = pneg %p130
      $region22: #{tpu_custom_call.1} parent=5 // pred_check_branch
        %133 = sbr.rel (%p131) target = $region24
      $region23: #{tpu_custom_call.1} parent=5 // pred_region
        // Predicated region
        $region25: #{tpu_custom_call.1} parent=23 // pred_check
          %p134 = pneg %p35
        $region26: #{tpu_custom_call.1} parent=23 // pred_check_branch
          %136 = sbr.rel (%p134) target = $region28
        $region27: #{tpu_custom_call.1} parent=23 // pred_region
          %s137 = sand.u32 %s25, 1
          %s138 = scalar_lea.sflag [#allocation3], %s137
          %s139 = sand.u32 %s25, 1
          %s140 = smul.addr %s139, 32
          %s141 = scalar_lea.vmem [#allocation2], %s140
          %s143 = ssub.s32 512, 512
          %144 = vsyncadd %s138, %s143
          %s145 = smul.addr %s15, 4
          %s146 = smul.addr %s145, 128
          %s147 = scalar_lea.hbm %s0, %s146
          %s148 = sshll.u32 %s141, 4
          %s149 = int_to_ptr.vmem [resolvable:$true] %s148
          %154 = dma.hbm_to_vmem [thread:$0]  %s147, 512, %s149, %s138, 128, 128, 8
        $region28: #{tpu_custom_call.1} parent=23 // pred_fallthru
          _
      $region24: #{tpu_custom_call.1} parent=5 // pred_fallthru
        _
      %p155 = scmp.le.s32.totalorder 1, %s15
      %p156 = scmp.lt.s32.totalorder %s15, 3
      %p157 = pnand %p155, %p156
      %p158 = pneg %p157
      // Predicated region
      $region29: #{tpu_custom_call.1} parent=5 // pred_check
        _
      $region30: #{tpu_custom_call.1} parent=5 // pred_check_branch
        %160 = sbr.rel (%p157) target = $region32
      $region31: #{tpu_custom_call.1} parent=5 // pred_region
        %s161 = ssub.s32 %s15, 1
        %s162 = sand.u32 %s28, 1
        %s163 = scalar_lea.sflag [#allocation3], %s162
        %s164 = sand.u32 %s28, 1
        %s165 = smul.addr %s164, 32
        %s166 = scalar_lea.vmem [#allocation2], %s165
        // Predicated region
        $region33: #{tpu_custom_call.1} parent=31 // pred_check
          %p167 = pneg %p41
        $region34: #{tpu_custom_call.1} parent=31 // pred_check_branch
          %169 = sbr.rel (%p167) target = $region36
        $region35: #{tpu_custom_call.1} parent=31 // pred_region
          %170 = dma.done %s163, 512
        $region36: #{tpu_custom_call.1} parent=31 // pred_fallthru
          _
        %s171 = sand.u32 %s28, 1
        %s172 = scalar_lea.sflag [#allocation3], %s171
        %s173 = sand.u32 %s28, 1
        %s174 = smul.addr %s173, 32
        %s175 = scalar_lea.vmem [#allocation2], %s174
        %p176 = pneg %p41
        %p177 = pneg %p38
        %p178 = pneg %p62
        %p179 = pneg %p59
        %p180 = pneg %p83
        %p181 = pneg %p80
        %p182 = pneg %p109
        %p183 = pneg %p106
        %s184 = sand.u32 %s96, 1
        %s185 = scalar_lea.sflag [#allocation4], %s184
        %s186 = sand.u32 %s96, 1
        %s187 = smul.addr %s186, 16
        %s188 = scalar_lea.vmem [#allocation5], %s187
        %v189 = vld [vmem:[%s1] sm:$0xff]
        %v190 = vld [vmem:[%s1 + $0x8] sm:$0xff]
        %v191 = vld [vmem:[%s166] sm:$0xff]
        %v192 = vld [vmem:[%s166 + $0x8] sm:$0xff]
        %v193 = vld [vmem:[%s166 + $0x10] sm:$0xff]
        %v194 = vld [vmem:[%s166 + $0x18] sm:$0xff]
        %v195 = vld [vmem:[%s2] sm:$0xff]
        %v196 = vld [vmem:[%s2 + $0x8] sm:$0xff]
        %198 = vset.pattern.permute.xlu0 0
        %199 = vperm.xlu0 %198, %v195
        %v200 = vpop.permute.xlu0 %199
        %203 = vset.pattern.permute.xlu0 0
        %204 = vperm.xlu0 %203, %v196
        %v205 = vpop.permute.xlu0 %204
        %vm207 = vcmask 261120
        %v209 = vsel %vm207, %v189, 0
        %v212 = vsel %vm207, %v190, 0
        %214 = vmatprep.subr.mxu0 0.0
        %215 = vmatpush1.msra.mxu0 %v191
        %216 = vmatprep.subr.mxu0 0.0
        %217 = vmatpush1.msra.mxu0 %v192
        %218 = vmatprep.subr.mxu0 0.0
        %219 = vmatpush1.msra.mxu0 %v193
        %220 = vmatprep.subr.mxu0 0.0
        %221 = vmatpush1.msra.mxu0 %v194
        %222 = vmatprep.subr.mxu0 0.0
        %223 = vmatpush1.msra.mxu0 0.0
        %224 = vmatprep.subr.mxu0 0.0
        %225 = vmatpush1.msra.mxu0 0.0
        %226 = vmatprep.subr.mxu0 0.0
        %227 = vmatpush1.msra.mxu0 0.0
        %228 = vmatprep.subr.mxu0 0.0
        %229 = vmatpush1.msra.mxu0 0.0
        %230 = vmatprep.subr.mxu0 0.0
        %231 = vmatpush1.msra.mxu0 0.0
        %232 = vmatprep.subr.mxu0 0.0
        %233 = vmatpush1.msra.mxu0 0.0
        %234 = vmatprep.subr.mxu0 0.0
        %235 = vmatpush1.msra.mxu0 0.0
        %236 = vmatprep.subr.mxu0 0.0
        %237 = vmatpush1.msra.mxu0 0.0
        %238 = vmatprep.subr.mxu0 0.0
        %239 = vmatpush1.msra.mxu0 0.0
        %240 = vmatprep.subr.mxu0 0.0
        %241 = vmatpush1.msra.mxu0 0.0
        %242 = vmatprep.subr.mxu0 0.0
        %243 = vmatpush1.msra.mxu0 0.0
        %244 = vmatprep.subr.mxu0 0.0
        %245 = vmatpush1.msra.mxu0 0.0
        %246 = vmatprep.subr.mxu0 0.0
        %247 = vmatpush1.msra.mxu0 0.0
        %248 = vmatprep.subr.mxu0 0.0
        %249 = vmatpush1.msra.mxu0 0.0
        %250 = vmatprep.subr.mxu0 0.0
        %251 = vmatpush1.msra.mxu0 0.0
        %252 = vmatprep.subr.mxu0 0.0
        %253 = vmatpush1.msra.mxu0 0.0
        %254 = vmatprep.subr.mxu0 0.0
        %255 = vmatpush1.msra.mxu0 0.0
        %256 = vmatprep.subr.mxu0 0.0
        %257 = vmatpush1.msra.mxu0 0.0
        %258 = vmatprep.subr.mxu0 0.0
        %259 = vmatpush1.msra.mxu0 0.0
        %260 = vmatprep.subr.mxu0 0.0
        %261 = vmatpush1.msra.mxu0 0.0
        %262 = vmatprep.subr.mxu0 0.0
        %263 = vmatpush1.msra.mxu0 0.0
        %264 = vmatprep.subr.mxu0 0.0
        %265 = vmatpush1.msra.mxu0 0.0
        %266 = vmatprep.subr.mxu0 0.0
        %267 = vmatpush1.msra.mxu0 0.0
        %268 = vmatprep.subr.mxu0 0.0
        %269 = vmatpush1.msra.mxu0 0.0
        %270 = vmatprep.subr.mxu0 0.0
        %271 = vmatpush1.msra.mxu0 0.0
        %272 = vmatprep.subr.mxu0 0.0
        %273 = vmatpush1.msra.mxu0 0.0
        %274 = vmatprep.subr.mxu0 0.0
        %275 = vmatpush1.msra.mxu0 0.0
        %276 = vmatprep.subr.mxu0 0.0
        %277 = vmatpush1.msra.mxu0 0.0
        %278 = vmatprep.mubr.f32.mxu0 0.0
        %279 = vmatmul.mubr.f32.gmra.mrb[0].mxu0 %v209
        %v280 = vpop.f32.mrb[0].mxu0
        %v281 = vadd.f32 %v200, %v280
        %v282 = vpop.f32.mrb[0].mxu0
        %283 = vmatprep.mubr.f32.mxu0 0.0
        %284 = vmatmul.mubr.f32.gmra.mrb[0].mxu0 %v212
        %v285 = vpop.f32.mrb[0].mxu0
        %v286 = vadd.f32 %v205, %v285
        %v287 = vpop.f32.mrb[0].mxu0
        %288 = vdwg.mxu0
        %vm289 = vcmask 523264
        %290 = vst.msk [vmem:[%s188] sm:$0xff] %vm289, %v281
        %291 = vst.msk [vmem:[%s188 + $0x8] sm:$0xff] %vm289, %v286
        %s292 = sand.u32 %s96, 1
        %s293 = scalar_lea.sflag [#allocation4], %s292
        %s294 = sand.u32 %s96, 1
        %s295 = smul.addr %s294, 16
        %s296 = scalar_lea.vmem [#allocation5], %s295
        // Predicated region
        $region37: #{tpu_custom_call.1} parent=31 // pred_check
          %p297 = pneg %p106
        $region38: #{tpu_custom_call.1} parent=31 // pred_check_branch
          %299 = sbr.rel (%p297) target = $region40
        $region39: #{tpu_custom_call.1} parent=31 // pred_region
          %s301 = ssub.s32 256, 256
          %302 = vsyncadd %s293, %s301
          %s303 = smul.addr %s20, 2
          %s304 = smul.addr %s303, 128
          %s305 = scalar_lea.hbm %s3, %s304
          %s306 = sshll.u32 %s296, 4
          %s307 = int_to_ptr.vmem [resolvable:$true] %s306
          %312 = dma.vmem_to_hbm [thread:$0]  %s307, 256, %s305, %s293, 128, 128, 8
        $region40: #{tpu_custom_call.1} parent=31 // pred_fallthru
          _
      $region32: #{tpu_custom_call.1} parent=5 // pred_fallthru
        _
      %p313 = scmp.le.s32.totalorder 2, %s15
      // Predicated region
      $region41: #{tpu_custom_call.1} parent=5 // pred_check
        %p314 = pneg %p313
      $region42: #{tpu_custom_call.1} parent=5 // pred_check_branch
        %316 = sbr.rel (%p314) target = $region44
      $region43: #{tpu_custom_call.1} parent=5 // pred_region
        %s317 = ssub.s32 %s15, 2
        // Predicated region
        $region45: #{tpu_custom_call.1} parent=43 // pred_check
          %p318 = pneg %p112
        $region46: #{tpu_custom_call.1} parent=43 // pred_check_branch
          %320 = sbr.rel (%p318) target = $region48
        $region47: #{tpu_custom_call.1} parent=43 // pred_region
          %s321 = sand.u32 %s97, 1
          %s322 = scalar_lea.sflag [#allocation4], %s321
          %s323 = sand.u32 %s97, 1
          %s324 = smul.addr %s323, 16
          %s325 = scalar_lea.vmem [#allocation5], %s324
          %326 = dma.done %s322, 256
        $region48: #{tpu_custom_call.1} parent=43 // pred_fallthru
          _
      $region44: #{tpu_custom_call.1} parent=5 // pred_fallthru
        _
    $region6: #{tpu_custom_call.1} parent=1 // loop_footer
      %s19 = sadd.s32 1, %s15
    $region7: #{tpu_custom_call.1} parent=1 // loop_footer_branch
      %14 = sbr.rel target = $region3
    $region8: #{tpu_custom_call.1} parent=1 // loop_exit
      _
    %327 = vsyncpa [#allocation3], 1
    %s328 = scalar_lea.sflag [#allocation3], 1
    %329 = vsyncpa %s328, 1
    %330 = vsyncpa [#allocation4], 1
    %s331 = scalar_lea.sflag [#allocation4], 1
    %332 = vsyncpa %s331, 1

</llo_original>
